<compile_context>
chip_gen: v6e
topology: v6e:2x2x1
jax: 0.10.0
libtpu: 0.0.40
codegen_flags: <defaults>
</compile_context>

<pallas_src>
import math

import jax
import jax.numpy as jnp
from jax.experimental import pallas as pl
from jax.experimental.pallas import tpu as pltpu


def _pos_enc_kernel(x_ref, pe_ref, o_ref):
    # 3-D path: x/o are (tS, B, D), pe is (tS, D)  -> broadcast over batch.
    # 2-D path: x/o/pe are (tS, B*D)               -> plain add.
    x = x_ref[...]
    pe = pe_ref[...]
    if x.ndim == 3:
        pe = pe[:, None, :]
    o_ref[...] = x + pe


def make_pe_table(d_model: int, max_len: int = 5000) -> jnp.ndarray:
    """Deterministic sinusoidal positional-encoding table, shape (max_len, d_model)."""
    position = jnp.arange(0, max_len, dtype=jnp.float32)[:, None]          # (max_len, 1)
    div_term = jnp.exp(
        jnp.arange(0, d_model, 2, dtype=jnp.float32) * (-math.log(10000.0) / d_model)
    )                                                                       # (d_model/2,)
    ang = position * div_term                                               # (max_len, d_model/2)
    pe = jnp.zeros((max_len, d_model), dtype=jnp.float32)
    pe = pe.at[:, 0::2].set(jnp.sin(ang))
    pe = pe.at[:, 1::2].set(jnp.cos(ang))
    return pe


def positional_encoding_forward(x: jnp.ndarray, pe_table: jnp.ndarray) -> jnp.ndarray:
    """x: (seq_len, batch, d_model); pe_table: (max_len, d_model)."""
    S, B, D = x.shape
    out_dtype = x.dtype
    itemsize = jnp.dtype(out_dtype).itemsize

    # Hoist the pe dtype cast out of the kernel.
    pe_slice = pe_table[:S, :].astype(out_dtype)            # (S, D) cheap JAX glue

    # Lane-dense output path when d_model doesn't fill full 128-lane vregs.
    lane_dense = (D % 128) != 0
    if lane_dense:
        W = B * D
        x2 = x.reshape(S, W)                                 # contiguous reshape (free)
        pe2 = jnp.tile(pe_slice, (1, B))                     # (S, B*D), matches flattened layout
    else:
        x2 = x
        pe2 = pe_slice

    # ---- tile-size choice: target ~4 MiB per x block, sublane-aligned ----
    sublane = max(8, 32 // itemsize)                         # 8 for f32, 16 for bf16, ...
    row_bytes = B * D * itemsize
    target_bytes = 4 * 1024 * 1024
    tS = max(1, target_bytes // max(row_bytes, 1))
    if tS >= S:
        tS = S                                               # full extent -> always legal
        S_pad = S
    else:
        tS = max(sublane, (tS // sublane) * sublane)
        S_pad = ((S + tS - 1) // tS) * tS
        if S_pad != S:
            pad = S_pad - S
            if lane_dense:
                x2 = jnp.pad(x2, ((0, pad), (0, 0)))
                pe2 = jnp.pad(pe2, ((0, pad), (0, 0)))
            else:
                x2 = jnp.pad(x2, ((0, pad), (0, 0), (0, 0)))
                pe2 = jnp.pad(pe2, ((0, pad), (0, 0)))

    grid = (S_pad // tS,)

    if lane_dense:
        in_specs = [
            pl.BlockSpec((tS, B * D), lambda i: (i, 0)),
            pl.BlockSpec((tS, B * D), lambda i: (i, 0)),
        ]
        out_spec = pl.BlockSpec((tS, B * D), lambda i: (i, 0))
        out_shape = jax.ShapeDtypeStruct((S_pad, B * D), out_dtype)
    else:
        in_specs = [
            pl.BlockSpec((tS, B, D), lambda i: (i, 0, 0)),
            pl.BlockSpec((tS, D), lambda i: (i, 0)),
        ]
        out_spec = pl.BlockSpec((tS, B, D), lambda i: (i, 0, 0))
        out_shape = jax.ShapeDtypeStruct((S_pad, B, D), out_dtype)

    out = pl.pallas_call(
        _pos_enc_kernel,
        out_shape=out_shape,
        grid=grid,
        in_specs=in_specs,
        out_specs=out_spec,
        compiler_params=pltpu.CompilerParams(
            dimension_semantics=("parallel",),               # independent tiles -> both TCs on v7x
        ),
    )(x2, pe2)

    out = out[:S]
    if lane_dense:
        out = out.reshape(S, B, D)
    return out


if __name__ == "__main__":
    # small shapes: seq=8, batch=2, d_model=32
    S, B, D = 8, 2, 32
    key = jax.random.PRNGKey(0)
    x = jax.random.normal(key, (S, B, D), dtype=jnp.float32)

    pe_table = make_pe_table(d_model=D, max_len=5000)

    out = positional_encoding_forward(x, pe_table)
    out = jax.block_until_ready(out)

    # sanity check against plain-JAX reference (eval-mode dropout = identity)
    ref = x + pe_table[:S, :][:, None, :]
    assert out.shape == (S, B, D)
    assert jnp.allclose(out, ref, atol=1e-6), "mismatch vs reference"

    print("KERNEL_OK")
</pallas_src>

<mosaic_0001>
module attributes {stable_mosaic.version = 11 : i64} {
  func.func @_pos_enc_kernel(%arg0: i32, %arg1: memref<8x64xf32, #tpu.memory_space<vmem>>, %arg2: memref<8x64xf32, #tpu.memory_space<vmem>>, %arg3: memref<8x64xf32, #tpu.memory_space<vmem>>) attributes {dimension_semantics = [#tpu.dimension_semantics<parallel>], iteration_bounds = array<i64: 1>, scalar_prefetch = 0 : i64, scratch_operands = 0 : i64, tpu.core_type = #tpu.core_type<tc>, window_params = [{transform_indices = @transform_0, window_bounds = array<i64: 8, 64>}, {transform_indices = @transform_1, window_bounds = array<i64: 8, 64>}, {transform_indices = @transform_2, window_bounds = array<i64: 8, 64>}]} {
    %c0 = arith.constant 0 : index
    %c0_0 = arith.constant 0 : index
    %0 = vector.load %arg1[%c0, %c0_0] : memref<8x64xf32, #tpu.memory_space<vmem>>, vector<8x64xf32>
    %c0_1 = arith.constant 0 : index
    %c0_2 = arith.constant 0 : index
    %1 = vector.load %arg2[%c0_1, %c0_2] : memref<8x64xf32, #tpu.memory_space<vmem>>, vector<8x64xf32>
    %2 = arith.addf %0, %1 : vector<8x64xf32>
    %c0_3 = arith.constant 0 : index
    %c0_4 = arith.constant 0 : index
    %3 = vector.load %arg3[%c0_3, %c0_4] : memref<8x64xf32, #tpu.memory_space<vmem>>, vector<8x64xf32>
    tpu.vector_store %arg3[%c0_3, %c0_4], %2 {strides = array<i32>} : memref<8x64xf32, #tpu.memory_space<vmem>>, vector<8x64xf32>,
    return
  }
  func.func @transform_0(%arg0: i32) -> (i32, i32) {
    %c0_i32 = arith.constant 0 : i32
    %c0_i32_0 = arith.constant 0 : i32
    return %arg0, %c0_i32 : i32, i32
  }
  func.func @transform_1(%arg0: i32) -> (i32, i32) {
    %c0_i32 = arith.constant 0 : i32
    %c0_i32_0 = arith.constant 0 : i32
    return %arg0, %c0_i32 : i32, i32
  }
  func.func @transform_2(%arg0: i32) -> (i32, i32) {
    %c0_i32 = arith.constant 0 : i32
    %c0_i32_0 = arith.constant 0 : i32
    return %arg0, %c0_i32 : i32, i32
  }
}

</mosaic_0001>

<llo_original>
// kernel: tpu_custom_call.1
$region0: #{tpu_custom_call.1}
  #allocation0 [shape = 'u32[]', space=smem, size = 0x4, offset = 0x4, fixed_abs, tag = 'smem constant byte address 0x4 - core index']
  #allocation1 [shape = 'u32[144,128]{1,0:T(1,128)}', space=vmem, size = 0x12000, scoped, tag = 'internal scratch']
  %s0 = inlined_call_operand.hbm [shape: f32[8,64], index: 0, kind: input, shape index: {}]
  %s1 = inlined_call_operand.hbm [shape: f32[8,64], index: 1, kind: input, shape index: {}]
  %s2 = inlined_call_operand.hbm [shape: f32[8,64], index: 2, kind: output, shape index: {}]
  %s3 = sld [smem:[#allocation0]]
  $region26: #{tpu_custom_call.1} parent=0
    _
  %s5 = ssub.s32 1, %s3
  %s6 = scalar_select 0, %s5, %s3
  $region1: #{tpu_custom_call.1} parent=0
    #allocation2 [shape = 'u8[4096]{0}', space=vmem, size = 0x1000, scoped, tag = 'input window, operand 0, single buffered']
    #allocation3 [shape = 's32[1]{0}', space=sflag, size = 0x4, scoped, tag = 'scoped memory for tpu_custom_call.1']
    #allocation4 [shape = 's32[1]{0}', space=sflag, size = 0x4, scoped, tag = 'scoped memory for tpu_custom_call.1']
    #allocation5 [shape = 'u8[4096]{0}', space=vmem, size = 0x1000, scoped, tag = 'input window, operand 1, single buffered']
    #allocation6 [shape = 's32[1]{0}', space=sflag, size = 0x4, scoped, tag = 'scoped memory for tpu_custom_call.1']
    #allocation7 [shape = 'u8[4096]{0}', space=vmem, size = 0x1000, scoped, tag = 'output window, operand 0, single buffered']
    %7 = vsyncpa [#allocation3], 0
    %8 = vsyncpa [#allocation6], 0
    %9 = vsyncpa [#allocation4], 0
    // Predicated region
    $region2: #{tpu_custom_call.1} parent=1 // pred_check
      _
    $region3: #{tpu_custom_call.1} parent=1 // pred_check_branch
      %11 = sbr.rel (0) target = $region5
    $region4: #{tpu_custom_call.1} parent=1 // pred_region
      %s13 = ssub.s32 128, 128
      %14 = vsyncadd [#allocation3], %s13
      %s16 = sshll.u32 [#allocation2], 4
      %s17 = int_to_ptr.vmem [resolvable:$true] %s16
      %19 = dma.hbm_to_vmem [thread:$0]  %s0, 128, %s17, [#allocation3]
    $region5: #{tpu_custom_call.1} parent=1 // pred_fallthru
      _
    // Predicated region
    $region6: #{tpu_custom_call.1} parent=1 // pred_check
      _
    $region7: #{tpu_custom_call.1} parent=1 // pred_check_branch
      %21 = sbr.rel (0) target = $region9
    $region8: #{tpu_custom_call.1} parent=1 // pred_region
      %s23 = ssub.s32 128, 128
      %24 = vsyncadd [#allocation6], %s23
      %s26 = sshll.u32 [#allocation5], 4
      %s27 = int_to_ptr.vmem [resolvable:$true] %s26
      %29 = dma.hbm_to_vmem [thread:$0]  %s1, 128, %s27, [#allocation6]
    $region9: #{tpu_custom_call.1} parent=1 // pred_fallthru
      _
    // Predicated region
    $region10: #{tpu_custom_call.1} parent=1 // pred_check
      _
    $region11: #{tpu_custom_call.1} parent=1 // pred_check_branch
      %31 = sbr.rel (0) target = $region13
    $region12: #{tpu_custom_call.1} parent=1 // pred_region
      %32 = dma.done [#allocation3], 128
    $region13: #{tpu_custom_call.1} parent=1 // pred_fallthru
      _
    // Predicated region
    $region14: #{tpu_custom_call.1} parent=1 // pred_check
      _
    $region15: #{tpu_custom_call.1} parent=1 // pred_check_branch
      %34 = sbr.rel (0) target = $region17
    $region16: #{tpu_custom_call.1} parent=1 // pred_region
      %35 = dma.done [#allocation6], 128
    $region17: #{tpu_custom_call.1} parent=1 // pred_fallthru
      _
    %v36 = vld [vmem:[#allocation2] sm:$0xff]
    %v37 = vld [vmem:[#allocation5] sm:$0xff]
    %v38 = vadd.f32 %v36, %v37
    %vm39 = vcmask 523264
    %40 = vst.msk [vmem:[#allocation7] sm:$0xff] %vm39, %v38
    // Predicated region
    $region18: #{tpu_custom_call.1} parent=1 // pred_check
      _
    $region19: #{tpu_custom_call.1} parent=1 // pred_check_branch
      %42 = sbr.rel (0) target = $region21
    $region20: #{tpu_custom_call.1} parent=1 // pred_region
      %s44 = ssub.s32 128, 128
      %45 = vsyncadd [#allocation4], %s44
      %s47 = sshll.u32 [#allocation7], 4
      %s48 = int_to_ptr.vmem [resolvable:$true] %s47
      %50 = dma.vmem_to_hbm [thread:$0]  %s48, 128, %s2, [#allocation4]
    $region21: #{tpu_custom_call.1} parent=1 // pred_fallthru
      _
    // Predicated region
    $region22: #{tpu_custom_call.1} parent=1 // pred_check
      _
    $region23: #{tpu_custom_call.1} parent=1 // pred_check_branch
      %52 = sbr.rel (0) target = $region25
    $region24: #{tpu_custom_call.1} parent=1 // pred_region
      %53 = dma.done [#allocation4], 128
    $region25: #{tpu_custom_call.1} parent=1 // pred_fallthru
      _
    %54 = vsyncpa [#allocation3], 1
    %55 = vsyncpa [#allocation6], 1
    %56 = vsyncpa [#allocation4], 1

</llo_original>
